<compile_context>
chip_gen: v7x
topology: tpu7x:2x2x1
jax: 0.10.0
libtpu: 0.0.40
codegen_flags: <defaults>
</compile_context>

<pallas_src>
import functools

import jax
import jax.numpy as jnp
from jax import lax
from jax.experimental import pallas as pl
from jax.experimental.pallas import tpu as pltpu

_LANE = 128
_TARGET_STEP_BYTES = 2 * 1024 * 1024  # ~2 MiB of streamed HBM traffic per grid step


def _round_up(x: int, m: int) -> int:
    return (x + m - 1) // m * m


def _round_down(x: int, m: int) -> int:
    return (x // m) * m


def _behavior_mlp_kernel(x_ref, w1_ref, b1_ref, w2_ref, b2_ref, o_ref):
    # x : (TM, in_dim)   w1: (hid, in_dim)   b1: (1, hid)
    # w2: (out2, hid)    b2: (1, out2)       o : (TM, out2)
    x = x_ref[...]

    # (TM, in_dim) . (hid, in_dim)^T -> (TM, hid); f32 accumulation on the MXU.
    h = lax.dot_general(x, w1_ref[...],
                        dimension_numbers=(((1,), (1,)), ((), ())),
                        preferred_element_type=jnp.float32)
    h = jnp.tanh(h + b1_ref[...].astype(jnp.float32))
    # TODO(synk): Dropout(p > 0) in training mode would need pltpu.prng_seed /
    # pltpu.prng_random_bits masking here; p = 0.0 / eval mode is the identity.

    h = h.astype(w2_ref.dtype)  # feed the second MXU pass in the streamed dtype
    y = lax.dot_general(h, w2_ref[...],
                        dimension_numbers=(((1,), (1,)), ((), ())),
                        preferred_element_type=jnp.float32)
    y = jnp.tanh(y + b2_ref[...].astype(jnp.float32))

    o_ref[...] = y.astype(o_ref.dtype)


def behavior_mlp_pallas(x, w1, b1, w2, b2, *, behavior_t, dropout=0.0,
                        training=False, stream_dtype=None):
    """BehaviorMLP forward.

    Args:
      x:  (b, t, in_dim) activations.
      w1: (hid, in_dim)  PyTorch nn.Linear weight of layer 1 (hid = out_dim // 2).
      b1: (hid,)         layer-1 bias.
      w2: (out2, hid)    layer-2 weight (out2 = out_dim // behavior_t).
      b2: (out2,)        layer-2 bias.
      stream_dtype: optional dtype (e.g. jnp.bfloat16) to stream x/w1/w2 in;
        accumulation and the bias+tanh epilogue stay f32.
    Returns:
      (b, t // behavior_t, behavior_t * out2)
    """
    b, t, in_dim = x.shape
    hid, in_dim_w = w1.shape
    out2 = w2.shape[0]
    assert in_dim_w == in_dim, (in_dim_w, in_dim)
    assert w2.shape[1] == hid, (w2.shape, hid)
    if t % behavior_t != 0:
        raise ValueError(f"t={t} must be divisible by behavior_t={behavior_t}")
    if training and dropout > 0.0:
        # TODO(synk): training-mode dropout needs an in-kernel PRNG mask.
        raise NotImplementedError("BehaviorMLP Pallas kernel only supports "
                                  "dropout=0.0 / eval mode.")

    out_dtype = x.dtype
    if stream_dtype is not None:
        x = x.astype(stream_dtype)
        w1 = w1.astype(stream_dtype)
        w2 = w2.astype(stream_dtype)
    stream_isz = jnp.dtype(x.dtype).itemsize
    out_isz = jnp.dtype(out_dtype).itemsize

    M = b * t
    x2 = x.reshape(M, in_dim)          # free: contiguous row-major view, no copy
    b1r = b1.reshape(1, hid)
    b2r = b2.reshape(1, out2)

    # ---- tile_m selection -------------------------------------------------
    # 1) Target ~2 MiB of streamed HBM bytes per grid step (amortize per-step
    #    pipeline overhead; small steps reach <30% of HBM roofline).
    stream_per_row = in_dim * stream_isz + out2 * out_isz
    tile_m = max(_LANE, _round_down(_TARGET_STEP_BYTES // stream_per_row, _LANE))

    # 2) Generation-aware VMEM budget (v7x has only 64 MiB physical VMEM).
    try:
        vmem_cap = int(pltpu.get_tpu_info().vmem_capacity_bytes)
    except Exception:
        vmem_cap = 64 * 1024 * 1024    # v7x-safe fallback
    vmem_budget = (3 * vmem_cap) // 4
    per_row_vmem = (2 * in_dim * stream_isz        # double-buffered X tile
                    + 2 * out2 * out_isz           # double-buffered Y tile
                    + (hid + out2) * 4)            # f32 intermediates h, y
    w_resident = 2 * ((hid * in_dim + out2 * hid) * stream_isz
                      + (hid + out2) * jnp.dtype(b1.dtype).itemsize)
    tile_cap = _round_down(max(_LANE, (vmem_budget - w_resident) // per_row_vmem),
                           _LANE)
    tile_m = min(tile_m, tile_cap)

    # 3) Keep >= 2 grid steps on non-tiny problems so both v7x TensorCores get work
    #    (v5e/v6e have 1 TC and are unaffected).
    m_ceil = _round_up(M, _LANE)
    if m_ceil >= 2 * _LANE:
        tile_m = min(tile_m, max(_LANE, _round_up(-(-m_ceil // 2), _LANE)))

    # 4) Small problems: one exact block (block dims == full array dims, no
    #    partial-block reads/writes at all).
    if M <= tile_m:
        tile_m = M
    grid_m = pl.cdiv(M, tile_m)

    needed = tile_m * per_row_vmem + w_resident
    vmem_limit = int(min(vmem_budget, max(16 * 1024 * 1024, 2 * needed)))

    cost = pl.CostEstimate(
        flops=2 * M * (in_dim * hid + hid * out2),
        transcendentals=M * (hid + out2),
        bytes_accessed=(M * in_dim * stream_isz + M * out2 * out_isz
                        + (hid * in_dim + out2 * hid) * stream_isz
                        + (hid + out2) * jnp.dtype(b1.dtype).itemsize),
    )

    y = pl.pallas_call(
        _behavior_mlp_kernel,
        out_shape=jax.ShapeDtypeStruct((M, out2), out_dtype),
        grid_spec=pltpu.PrefetchScalarGridSpec(
            num_scalar_prefetch=0,
            grid=(grid_m,),
            in_specs=[
                pl.BlockSpec((tile_m, in_dim), lambda i: (i, 0)),  # X tile (natural)
                pl.BlockSpec((hid, in_dim), lambda i: (0, 0)),     # W1 (resident)
                pl.BlockSpec((1, hid), lambda i: (0, 0)),          # b1
                pl.BlockSpec((out2, hid), lambda i: (0, 0)),       # W2 (resident)
                pl.BlockSpec((1, out2), lambda i: (0, 0)),         # b2
            ],
            out_specs=pl.BlockSpec((tile_m, out2), lambda i: (i, 0)),
        ),
        compiler_params=pltpu.CompilerParams(
            dimension_semantics=("parallel",),
            vmem_limit_bytes=vmem_limit,
        ),
        cost_estimate=cost,
    )(x2, w1, b1r, w2, b2r)

    # Row-major (M, out2) == (b, t, out2); the module's reshape is free.
    return y.reshape(b, t // behavior_t, behavior_t * out2)


def behavior_mlp_ref(x, w1, b1, w2, b2, *, behavior_t):
    b, t, _ = x.shape
    h = jnp.tanh(x @ w1.T + b1)
    y = jnp.tanh(h @ w2.T + b2)
    return y.reshape(b, t // behavior_t, -1)


if __name__ == "__main__":
    # Small shapes consistent with the module.
    B, T = 2, 8
    IN_DIM = 32
    OUT_DIM = 64
    BEHAVIOR_T = 4
    HID = OUT_DIM // 2                 # 32
    OUT2 = OUT_DIM // BEHAVIOR_T       # 16

    key = jax.random.PRNGKey(0)
    kx, kw1, kb1, kw2, kb2 = jax.random.split(key, 5)

    x = jax.random.normal(kx, (B, T, IN_DIM), dtype=jnp.float32)
    # Parameters in PyTorch nn.Linear layout: weight = (out_features, in_features),
    # bias = (out_features,).
    w1 = jax.random.normal(kw1, (HID, IN_DIM), dtype=jnp.float32) * 0.1
    b1 = jax.random.normal(kb1, (HID,), dtype=jnp.float32) * 0.1
    w2 = jax.random.normal(kw2, (OUT2, HID), dtype=jnp.float32) * 0.1
    b2 = jax.random.normal(kb2, (OUT2,), dtype=jnp.float32) * 0.1

    ref = behavior_mlp_ref(x, w1, b1, w2, b2, behavior_t=BEHAVIOR_T)

    # f32 streaming: tight tolerance vs reference.
    fn_f32 = jax.jit(functools.partial(behavior_mlp_pallas, behavior_t=BEHAVIOR_T))
    out = jax.block_until_ready(fn_f32(x, w1, b1, w2, b2))
    assert out.shape == (B, T // BEHAVIOR_T, BEHAVIOR_T * OUT2), out.shape
    assert jnp.allclose(out, ref, atol=1e-5, rtol=1e-5), "f32 mismatch vs reference"

    # bf16 streaming (v6e/v7x HBM-bound win): f32 accumulation, loose tolerance.
    fn_bf16 = jax.jit(functools.partial(behavior_mlp_pallas, behavior_t=BEHAVIOR_T,
                                        stream_dtype=jnp.bfloat16))
    out_bf16 = jax.block_until_ready(fn_bf16(x, w1, b1, w2, b2))
    assert out_bf16.shape == out.shape, out_bf16.shape
    assert jnp.allclose(out_bf16, ref, atol=5e-2, rtol=5e-2), "bf16 mismatch"

    print("KERNEL_OK")
</pallas_src>

<mosaic_0001>
module attributes {stable_mosaic.version = 11 : i64} {
  func.func @_behavior_mlp_kernel(%arg0: i32, %arg1: memref<16x32xf32, #tpu.memory_space<vmem>>, %arg2: memref<32x32xf32, #tpu.memory_space<vmem>>, %arg3: memref<1x32xf32, #tpu.memory_space<vmem>>, %arg4: memref<16x32xf32, #tpu.memory_space<vmem>>, %arg5: memref<1x16xf32, #tpu.memory_space<vmem>>, %arg6: memref<16x16xf32, #tpu.memory_space<vmem>>) attributes {dimension_semantics = [#tpu.dimension_semantics<parallel>], iteration_bounds = array<i64: 1>, scalar_prefetch = 0 : i64, scratch_operands = 0 : i64, tpu.core_type = #tpu.core_type<tc>, window_params = [{transform_indices = @transform_0, window_bounds = array<i64: 16, 32>}, {pipeline_mode = #tpu.pipeline_mode<synchronous>, transform_indices = @transform_1, window_bounds = array<i64: 32, 32>}, {pipeline_mode = #tpu.pipeline_mode<synchronous>, transform_indices = @transform_2, window_bounds = array<i64: 1, 32>}, {pipeline_mode = #tpu.pipeline_mode<synchronous>, transform_indices = @transform_3, window_bounds = array<i64: 16, 32>}, {pipeline_mode = #tpu.pipeline_mode<synchronous>, transform_indices = @transform_4, window_bounds = array<i64: 1, 16>}, {transform_indices = @transform_5, window_bounds = array<i64: 16, 16>}]} {
    %c0 = arith.constant 0 : index
    %c0_0 = arith.constant 0 : index
    %0 = vector.load %arg1[%c0, %c0_0] : memref<16x32xf32, #tpu.memory_space<vmem>>, vector<16x32xf32>
    %c0_1 = arith.constant 0 : index
    %c0_2 = arith.constant 0 : index
    %1 = vector.load %arg2[%c0_1, %c0_2] : memref<32x32xf32, #tpu.memory_space<vmem>>, vector<32x32xf32>
    %cst = arith.constant dense<0.000000e+00> : vector<16x32xf32>
    %2 = tpu.matmul %0, %1, %cst {dimension_numbers = #tpu.dot_dimension_numbers<[1], [1], [0], [0], [0, 0, 1, 0], [], []>} : vector<16x32xf32>, vector<32x32xf32>, vector<16x32xf32> -> vector<16x32xf32>
    %c0_3 = arith.constant 0 : index
    %c0_4 = arith.constant 0 : index
    %3 = vector.load %arg3[%c0_3, %c0_4] : memref<1x32xf32, #tpu.memory_space<vmem>>, vector<1x32xf32>
    %4 = vector.broadcast %3 : vector<1x32xf32> to vector<16x32xf32>
    %5 = arith.addf %2, %4 : vector<16x32xf32>
    %6 = math.tanh %5 : vector<16x32xf32>
    %c0_5 = arith.constant 0 : index
    %c0_6 = arith.constant 0 : index
    %7 = vector.load %arg4[%c0_5, %c0_6] : memref<16x32xf32, #tpu.memory_space<vmem>>, vector<16x32xf32>
    %cst_7 = arith.constant dense<0.000000e+00> : vector<16x16xf32>
    %8 = tpu.matmul %6, %7, %cst_7 {dimension_numbers = #tpu.dot_dimension_numbers<[1], [1], [0], [0], [0, 0, 1, 0], [], []>} : vector<16x32xf32>, vector<16x32xf32>, vector<16x16xf32> -> vector<16x16xf32>
    %c0_8 = arith.constant 0 : index
    %c0_9 = arith.constant 0 : index
    %9 = vector.load %arg5[%c0_8, %c0_9] : memref<1x16xf32, #tpu.memory_space<vmem>>, vector<1x16xf32>
    %10 = vector.broadcast %9 : vector<1x16xf32> to vector<16x16xf32>
    %11 = arith.addf %8, %10 : vector<16x16xf32>
    %12 = math.tanh %11 : vector<16x16xf32>
    %c0_10 = arith.constant 0 : index
    %c0_11 = arith.constant 0 : index
    %13 = vector.load %arg6[%c0_10, %c0_11] : memref<16x16xf32, #tpu.memory_space<vmem>>, vector<16x16xf32>
    tpu.vector_store %arg6[%c0_10, %c0_11], %12 {strides = array<i32>} : memref<16x16xf32, #tpu.memory_space<vmem>>, vector<16x16xf32>,
    return
  }
  func.func @transform_0(%arg0: i32) -> (i32, i32) {
    %c0_i32 = arith.constant 0 : i32
    %c0_i32_0 = arith.constant 0 : i32
    return %arg0, %c0_i32 : i32, i32
  }
  func.func @transform_1(%arg0: i32) -> (i32, i32) {
    %c0_i32 = arith.constant 0 : i32
    %c0_i32_0 = arith.constant 0 : i32
    %c0_i32_1 = arith.constant 0 : i32
    return %c0_i32, %c0_i32_0 : i32, i32
  }
  func.func @transform_2(%arg0: i32) -> (i32, i32) {
    %c0_i32 = arith.constant 0 : i32
    %c0_i32_0 = arith.constant 0 : i32
    %c0_i32_1 = arith.constant 0 : i32
    return %c0_i32, %c0_i32_0 : i32, i32
  }
  func.func @transform_3(%arg0: i32) -> (i32, i32) {
    %c0_i32 = arith.constant 0 : i32
    %c0_i32_0 = arith.constant 0 : i32
    %c0_i32_1 = arith.constant 0 : i32
    return %c0_i32, %c0_i32_0 : i32, i32
  }
  func.func @transform_4(%arg0: i32) -> (i32, i32) {
    %c0_i32 = arith.constant 0 : i32
    %c0_i32_0 = arith.constant 0 : i32
    %c0_i32_1 = arith.constant 0 : i32
    return %c0_i32, %c0_i32_0 : i32, i32
  }
  func.func @transform_5(%arg0: i32) -> (i32, i32) {
    %c0_i32 = arith.constant 0 : i32
    %c0_i32_0 = arith.constant 0 : i32
    return %arg0, %c0_i32 : i32, i32
  }
}

</mosaic_0001>

<llo_original>
// kernel: behavior_mlp_pallas.1
$region0: #{behavior_mlp_pallas.1}
  #allocation0 [shape = 'u32[]', space=smem, size = 0x4, offset = 0x4, fixed_abs, tag = 'smem constant byte address 0x4 - core index']
  #allocation1 [shape = 'u32[144,128]{1,0:T(1,128)}', space=vmem, size = 0x12000, scoped, tag = 'internal scratch']
  %s0 = inlined_call_operand.hbm [shape: f32[16,32], index: 0, kind: input, shape index: {}]
  %s1 = inlined_call_operand.hbm [shape: f32[32,32], index: 1, kind: input, shape index: {}]
  %s2 = inlined_call_operand.vmem [shape: f32[1,32], index: 2, kind: input, shape index: {}]
  %s3 = inlined_call_operand.vmem [shape: f32[16,32], index: 3, kind: input, shape index: {}]
  %s4 = inlined_call_operand.vmem [shape: f32[1,16], index: 4, kind: input, shape index: {}]
  %s5 = inlined_call_operand.vmem [shape: f32[16,16], index: 5, kind: output, shape index: {}]
  %s6 = sld [smem:[#allocation0]]
  $region38: #{behavior_mlp_pallas.1} parent=0
    _
  %s8 = ssub.s32 1, %s6
  %s9 = scalar_select 0, %s8, %s6
  $region1: #{behavior_mlp_pallas.1} parent=0
    #allocation2 [shape = 'u8[8192]{0}', space=vmem, size = 0x2000, scoped, tag = 'input window, operand 0, single buffered']
    #allocation3 [shape = 's32[1]{0}', space=sflag, size = 0x4, scoped, tag = 'scoped memory for behavior_mlp_pallas.1']
    #allocation4 [shape = 'u8[16384]{0}', space=vmem, size = 0x4000, scoped, tag = 'input window, operand 1, single buffered']
    #allocation5 [shape = 's32[1]{0}', space=sflag, size = 0x4, scoped, tag = 'scoped memory for behavior_mlp_pallas.1']
    %10 = vsyncpa [#allocation3], 0
    %11 = vsyncpa [#allocation5], 0
    // Predicated region
    $region2: #{behavior_mlp_pallas.1} parent=1 // pred_check
      _
    $region3: #{behavior_mlp_pallas.1} parent=1 // pred_check_branch
      %13 = sbr.rel (0) target = $region5
    $region4: #{behavior_mlp_pallas.1} parent=1 // pred_region
      %s15 = ssub.s32 256, 256
      %16 = vsyncadd [#allocation3], %s15
      %s17 = sshll.u32 [#allocation2], 4
      %s18 = int_to_ptr.vmem [resolvable:$true] %s17
      %23 = dma.hbm_to_vmem [thread:$0]  %s0, 256, %s18, [#allocation3], 128, 128, 8
    $region5: #{behavior_mlp_pallas.1} parent=1 // pred_fallthru
      _
    // Predicated region
    $region6: #{behavior_mlp_pallas.1} parent=1 // pred_check
      _
    $region7: #{behavior_mlp_pallas.1} parent=1 // pred_check_branch
      %25 = sbr.rel (0) target = $region9
    $region8: #{behavior_mlp_pallas.1} parent=1 // pred_region
      %s27 = ssub.s32 512, 512
      %28 = vsyncadd [#allocation5], %s27
      %s29 = sshll.u32 [#allocation4], 4
      %s30 = int_to_ptr.vmem [resolvable:$true] %s29
      %35 = dma.hbm_to_vmem [thread:$0]  %s1, 512, %s30, [#allocation5], 128, 128, 8
    $region9: #{behavior_mlp_pallas.1} parent=1 // pred_fallthru
      _
    // Predicated region
    $region10: #{behavior_mlp_pallas.1} parent=1 // pred_check
      _
    $region11: #{behavior_mlp_pallas.1} parent=1 // pred_check_branch
      %37 = sbr.rel (0) target = $region13
    $region12: #{behavior_mlp_pallas.1} parent=1 // pred_region
      _
    $region13: #{behavior_mlp_pallas.1} parent=1 // pred_fallthru
      _
    // Predicated region
    $region14: #{behavior_mlp_pallas.1} parent=1 // pred_check
      _
    $region15: #{behavior_mlp_pallas.1} parent=1 // pred_check_branch
      %39 = sbr.rel (0) target = $region17
    $region16: #{behavior_mlp_pallas.1} parent=1 // pred_region
      _
    $region17: #{behavior_mlp_pallas.1} parent=1 // pred_fallthru
      _
    // Predicated region
    $region18: #{behavior_mlp_pallas.1} parent=1 // pred_check
      _
    $region19: #{behavior_mlp_pallas.1} parent=1 // pred_check_branch
      %41 = sbr.rel (0) target = $region21
    $region20: #{behavior_mlp_pallas.1} parent=1 // pred_region
      _
    $region21: #{behavior_mlp_pallas.1} parent=1 // pred_fallthru
      _
    // Predicated region
    $region22: #{behavior_mlp_pallas.1} parent=1 // pred_check
      _
    $region23: #{behavior_mlp_pallas.1} parent=1 // pred_check_branch
      %43 = sbr.rel (0) target = $region25
    $region24: #{behavior_mlp_pallas.1} parent=1 // pred_region
      %44 = dma.done [#allocation3], 256
    $region25: #{behavior_mlp_pallas.1} parent=1 // pred_fallthru
      _
    // Predicated region
    $region26: #{behavior_mlp_pallas.1} parent=1 // pred_check
      _
    $region27: #{behavior_mlp_pallas.1} parent=1 // pred_check_branch
      %46 = sbr.rel (0) target = $region29
    $region28: #{behavior_mlp_pallas.1} parent=1 // pred_region
      %47 = dma.done [#allocation5], 512
    $region29: #{behavior_mlp_pallas.1} parent=1 // pred_fallthru
      _
    %v48 = vld [vmem:[#allocation2] sm:$0xff]
    %v49 = vld [vmem:[#allocation2 + $0x8] sm:$0xff]
    %v50 = vld [vmem:[#allocation4] sm:$0xff]
    %v51 = vld [vmem:[#allocation4 + $0x8] sm:$0xff]
    %v52 = vld [vmem:[#allocation4 + $0x10] sm:$0xff]
    %v53 = vld [vmem:[#allocation4 + $0x18] sm:$0xff]
    %v54 = vld [vmem:[%s2] sm:$0x1]
    %v56 = vlaneseq
    %v57 = vshrl.u32 %v56, 7
    %v58 = vsub.s32 0, %v57
    %v59 = vrot.slane %v54, %v58
    %vm61 = vcmask 261120
    %v63 = vsel %vm61, %v48, 0
    %v66 = vsel %vm61, %v49, 0
    %v69 = vsel %vm61, %v50, 0
    %v72 = vsel %vm61, %v51, 0
    %v75 = vsel %vm61, %v52, 0
    %v78 = vsel %vm61, %v53, 0
    %80 = vmatprep.subr.mxu0 0.0
    %81 = vmatpush1.xpose.msra.mxu0 %v69
    %82 = vmatprep.subr.mxu0 0.0
    %83 = vmatpush1.xpose.msra.mxu0 %v72
    %84 = vmatprep.subr.mxu0 0.0
    %85 = vmatpush1.xpose.msra.mxu0 %v75
    %86 = vmatprep.subr.mxu0 0.0
    %87 = vmatpush1.xpose.msra.mxu0 %v78
    %88 = vmatprep.subr.mxu0 0.0
    %89 = vmatpush1.xpose.msra.mxu0 0.0
    %90 = vmatprep.subr.mxu0 0.0
    %91 = vmatpush1.xpose.msra.mxu0 0.0
    %92 = vmatprep.subr.mxu0 0.0
    %93 = vmatpush1.xpose.msra.mxu0 0.0
    %94 = vmatprep.subr.mxu0 0.0
    %95 = vmatpush1.xpose.msra.mxu0 0.0
    %96 = vmatprep.subr.mxu0 0.0
    %97 = vmatpush1.xpose.msra.mxu0 0.0
    %98 = vmatprep.subr.mxu0 0.0
    %99 = vmatpush1.xpose.msra.mxu0 0.0
    %100 = vmatprep.subr.mxu0 0.0
    %101 = vmatpush1.xpose.msra.mxu0 0.0
    %102 = vmatprep.subr.mxu0 0.0
    %103 = vmatpush1.xpose.msra.mxu0 0.0
    %104 = vmatprep.subr.mxu0 0.0
    %105 = vmatpush1.xpose.msra.mxu0 0.0
    %106 = vmatprep.subr.mxu0 0.0
    %107 = vmatpush1.xpose.msra.mxu0 0.0
    %108 = vmatprep.subr.mxu0 0.0
    %109 = vmatpush1.xpose.msra.mxu0 0.0
    %110 = vmatprep.subr.mxu0 0.0
    %111 = vmatpush1.xpose.msra.mxu0 0.0
    %112 = vmatprep.subr.mxu0 0.0
    %113 = vmatpush1.xpose.msra.mxu0 0.0
    %114 = vmatprep.subr.mxu0 0.0
    %115 = vmatpush1.xpose.msra.mxu0 0.0
    %116 = vmatprep.subr.mxu0 0.0
    %117 = vmatpush1.xpose.msra.mxu0 0.0
    %118 = vmatprep.subr.mxu0 0.0
    %119 = vmatpush1.xpose.msra.mxu0 0.0
    %120 = vmatprep.subr.mxu0 0.0
    %121 = vmatpush1.xpose.msra.mxu0 0.0
    %122 = vmatprep.subr.mxu0 0.0
    %123 = vmatpush1.xpose.msra.mxu0 0.0
    %124 = vmatprep.subr.mxu0 0.0
    %125 = vmatpush1.xpose.msra.mxu0 0.0
    %126 = vmatprep.subr.mxu0 0.0
    %127 = vmatpush1.xpose.msra.mxu0 0.0
    %128 = vmatprep.subr.mxu0 0.0
    %129 = vmatpush1.xpose.msra.mxu0 0.0
    %130 = vmatprep.subr.mxu0 0.0
    %131 = vmatpush1.xpose.msra.mxu0 0.0
    %132 = vmatprep.subr.mxu0 0.0
    %133 = vmatpush1.xpose.msra.mxu0 0.0
    %134 = vmatprep.subr.mxu0 0.0
    %135 = vmatpush1.xpose.msra.mxu0 0.0
    %136 = vmatprep.subr.mxu0 0.0
    %137 = vmatpush1.xpose.msra.mxu0 0.0
    %138 = vmatprep.subr.mxu0 0.0
    %139 = vmatpush1.xpose.msra.mxu0 0.0
    %140 = vmatprep.subr.mxu0 0.0
    %141 = vmatpush1.xpose.msra.mxu0 0.0
    %142 = vmatprep.subr.mxu0 0.0
    %143 = vmatpush1.xpose.msra.mxu0 0.0
    %144 = vmatprep.mubr.f32.mxu0 0.0
    %145 = vmatmul.mubr.f32.gmra.mrb[0].mxu0 %v63
    %v146 = vpop.f32.mrb[0].mxu0
    %v147 = vadd.f32 %v59, %v146
    %v148 = vpop.f32.mrb[0].mxu0
    %149 = vmatprep.mubr.f32.mxu0 0.0
    %150 = vmatmul.mubr.f32.gmra.mrb[0].mxu0 %v66
    %v151 = vpop.f32.mrb[0].mxu0
    %v152 = vadd.f32 %v59, %v151
    %v153 = vpop.f32.mrb[0].mxu0
    %154 = vdwg.mxu0
    %v155 = vtanh.pop %v147
    %v156 = vtanh.pop %v152
    %v157 = vld [vmem:[%s3] sm:$0xff]
    %v158 = vld [vmem:[%s3 + $0x8] sm:$0xff]
    %v159 = vld [vmem:[%s4] sm:$0x1]
    %v161 = vlaneseq
    %v162 = vshrl.u32 %v161, 7
    %v163 = vsub.s32 0, %v162
    %v164 = vrot.slane %v159, %v163
    %v167 = vsel %vm61, %v155, 0
    %v170 = vsel %vm61, %v156, 0
    %v173 = vsel %vm61, %v157, 0
    %v176 = vsel %vm61, %v158, 0
    %178 = vmatprep.subr.mxu0 0.0
    %179 = vmatpush1.xpose.msra.mxu0 %v173
    %180 = vmatprep.subr.mxu0 0.0
    %181 = vmatpush1.xpose.msra.mxu0 %v176
    %182 = vmatprep.subr.mxu0 0.0
    %183 = vmatpush1.xpose.msra.mxu0 0.0
    %184 = vmatprep.subr.mxu0 0.0
    %185 = vmatpush1.xpose.msra.mxu0 0.0
    %186 = vmatprep.subr.mxu0 0.0
    %187 = vmatpush1.xpose.msra.mxu0 0.0
    %188 = vmatprep.subr.mxu0 0.0
    %189 = vmatpush1.xpose.msra.mxu0 0.0
    %190 = vmatprep.subr.mxu0 0.0
    %191 = vmatpush1.xpose.msra.mxu0 0.0
    %192 = vmatprep.subr.mxu0 0.0
    %193 = vmatpush1.xpose.msra.mxu0 0.0
    %194 = vmatprep.subr.mxu0 0.0
    %195 = vmatpush1.xpose.msra.mxu0 0.0
    %196 = vmatprep.subr.mxu0 0.0
    %197 = vmatpush1.xpose.msra.mxu0 0.0
    %198 = vmatprep.subr.mxu0 0.0
    %199 = vmatpush1.xpose.msra.mxu0 0.0
    %200 = vmatprep.subr.mxu0 0.0
    %201 = vmatpush1.xpose.msra.mxu0 0.0
    %202 = vmatprep.subr.mxu0 0.0
    %203 = vmatpush1.xpose.msra.mxu0 0.0
    %204 = vmatprep.subr.mxu0 0.0
    %205 = vmatpush1.xpose.msra.mxu0 0.0
    %206 = vmatprep.subr.mxu0 0.0
    %207 = vmatpush1.xpose.msra.mxu0 0.0
    %208 = vmatprep.subr.mxu0 0.0
    %209 = vmatpush1.xpose.msra.mxu0 0.0
    %210 = vmatprep.subr.mxu0 0.0
    %211 = vmatpush1.xpose.msra.mxu0 0.0
    %212 = vmatprep.subr.mxu0 0.0
    %213 = vmatpush1.xpose.msra.mxu0 0.0
    %214 = vmatprep.subr.mxu0 0.0
    %215 = vmatpush1.xpose.msra.mxu0 0.0
    %216 = vmatprep.subr.mxu0 0.0
    %217 = vmatpush1.xpose.msra.mxu0 0.0
    %218 = vmatprep.subr.mxu0 0.0
    %219 = vmatpush1.xpose.msra.mxu0 0.0
    %220 = vmatprep.subr.mxu0 0.0
    %221 = vmatpush1.xpose.msra.mxu0 0.0
    %222 = vmatprep.subr.mxu0 0.0
    %223 = vmatpush1.xpose.msra.mxu0 0.0
    %224 = vmatprep.subr.mxu0 0.0
    %225 = vmatpush1.xpose.msra.mxu0 0.0
    %226 = vmatprep.subr.mxu0 0.0
    %227 = vmatpush1.xpose.msra.mxu0 0.0
    %228 = vmatprep.subr.mxu0 0.0
    %229 = vmatpush1.xpose.msra.mxu0 0.0
    %230 = vmatprep.subr.mxu0 0.0
    %231 = vmatpush1.xpose.msra.mxu0 0.0
    %232 = vmatprep.subr.mxu0 0.0
    %233 = vmatpush1.xpose.msra.mxu0 0.0
    %234 = vmatprep.subr.mxu0 0.0
    %235 = vmatpush1.xpose.msra.mxu0 0.0
    %236 = vmatprep.subr.mxu0 0.0
    %237 = vmatpush1.xpose.msra.mxu0 0.0
    %238 = vmatprep.subr.mxu0 0.0
    %239 = vmatpush1.xpose.msra.mxu0 0.0
    %240 = vmatprep.subr.mxu0 0.0
    %241 = vmatpush1.xpose.msra.mxu0 0.0
    %242 = vmatprep.mubr.f32.mxu0 0.0
    %243 = vmatmul.mubr.f32.gmra.mrb[0].mxu0 %v167
    %v244 = vpop.f32.mrb[0].mxu0
    %v245 = vadd.f32 %v164, %v244
    %v246 = vpop.f32.mrb[0].mxu0
    %247 = vmatprep.mubr.f32.mxu0 0.0
    %248 = vmatmul.mubr.f32.gmra.mrb[0].mxu0 %v170
    %v249 = vpop.f32.mrb[0].mxu0
    %v250 = vadd.f32 %v164, %v249
    %v251 = vpop.f32.mrb[0].mxu0
    %252 = vdwg.mxu0
    %v253 = vtanh.pop %v245
    %v254 = vtanh.pop %v250
    %vm255 = vcmask 130048
    %256 = vst.msk [vmem:[%s5] sm:$0xff] %vm255, %v253
    %257 = vst.msk [vmem:[%s5 + $0x8] sm:$0xff] %vm255, %v254
    // Predicated region
    $region30: #{behavior_mlp_pallas.1} parent=1 // pred_check
      _
    $region31: #{behavior_mlp_pallas.1} parent=1 // pred_check_branch
      %259 = sbr.rel (0) target = $region33
    $region32: #{behavior_mlp_pallas.1} parent=1 // pred_region
      _
    $region33: #{behavior_mlp_pallas.1} parent=1 // pred_fallthru
      _
    // Predicated region
    $region34: #{behavior_mlp_pallas.1} parent=1 // pred_check
      _
    $region35: #{behavior_mlp_pallas.1} parent=1 // pred_check_branch
      %261 = sbr.rel (0) target = $region37
    $region36: #{behavior_mlp_pallas.1} parent=1 // pred_region
      _
    $region37: #{behavior_mlp_pallas.1} parent=1 // pred_fallthru
      _
    %262 = vsyncpa [#allocation3], 1
    %263 = vsyncpa [#allocation5], 1

</llo_original>
